<compile_context>
chip_gen: v6e
topology: v6e:2x2x1
jax: 0.10.0
libtpu: 0.0.40
codegen_flags: <defaults>
</compile_context>

<pallas_src>
import functools

import jax
import jax.numpy as jnp
from jax.experimental import pallas as pl
from jax.experimental.pallas import tpu as pltpu

SEQ_TIME = 4  # module slices x[:, :seq_time, :]


def _round_up(n, m):
    return ((n + m - 1) // m) * m


def _slab_layout(input_size, hidden_size, output_size, num_heads):
    """Static row/column layout of the single parameter slab (all 8-row aligned)."""
    H = hidden_size
    out_pad = _round_up(output_size, 128)
    slab_w = max(_round_up(4 * H, 128), out_pad)
    r = 0
    r_ih = r
    r += _round_up(input_size, 8)
    r_hh = r
    r += _round_up(H, 8)
    r_qkv = r
    r += _round_up(H, 8)
    r_comb = r
    r += _round_up(H, 8)
    r_g = r
    r += _round_up(H, 8)
    r_gt = r
    r += _round_up(num_heads, 8)
    r_b = r
    r += 8
    return dict(slab_w=slab_w, out_pad=out_pad, rows=r,
                r_ih=r_ih, r_hh=r_hh, r_qkv=r_qkv, r_comb=r_comb,
                r_g=r_g, r_gt=r_gt, r_b=r_b)


# ----------------------------------------------------------------------------- kernel
def lstm_attn_kernel(
    x_ref,        # (T*B, In)  t-major: row = t*B + b
    slab_ref,     # (ROWS, SLAB_W) consolidated f32 parameter slab
    out_ref,      # (B_PAD, OUT_PAD) lane/sublane-dense padded output
    *,
    hidden_size: int,
    num_heads: int,
    seq_time: int,
    input_size: int,
    out_pad: int,
    b_pad: int,
    r_ih: int, r_hh: int, r_qkv: int, r_comb: int, r_g: int, r_gt: int, r_b: int,
):
    H = hidden_size
    nh = num_heads
    T = seq_time
    In = input_size
    TB = x_ref.shape[0]
    B = TB // T
    f32 = jnp.float32

    # ---- unpack the parameter slab (static, 8-row-aligned segment offsets) ----
    w_ih_t = slab_ref[r_ih:r_ih + In, 0:4 * H]          # (In, 4H)
    w_hh_t = slab_ref[r_hh:r_hh + H, 0:4 * H]           # (H, 4H)
    w_qkv_t = slab_ref[r_qkv:r_qkv + H, 0:3 * H]        # (H, 3H)
    w_comb_t = slab_ref[r_comb:r_comb + H, 0:out_pad]   # (H, OUT_PAD)
    g_mat = slab_ref[r_g:r_g + H, 0:nh]                 # (H, nh)  per-head reduce
    g_mat_t = slab_ref[r_gt:r_gt + nh, 0:H]             # (nh, H)  per-head expand
    b_blk = slab_ref[r_b:r_b + 8, :]                    # aligned 8-row bias block
    b_lstm = b_blk[0:1, 0:4 * H]                        # (1, 4H)
    b_qkv = b_blk[1:2, 0:3 * H]                         # (1, 3H)
    b_out = b_blk[2:3, 0:out_pad]                       # (1, OUT_PAD)

    # ---- LSTM: input projection for every timestep in one MXU op ----
    x = x_ref[...]
    xg = jnp.dot(x, w_ih_t, preferred_element_type=f32) + b_lstm       # (T*B, 4H)

    h = jnp.zeros((B, H), f32)
    c = jnp.zeros((B, H), f32)
    hs = []
    for t in range(T):  # PyTorch gate order: i, f, g, o
        gates = (xg[t * B:(t + 1) * B, :]
                 + jnp.dot(h, w_hh_t, preferred_element_type=f32))     # (B, 4H)
        sig = jax.nn.sigmoid(gates)          # single full 128-lane EUP push
        i_g = sig[:, 0:H]
        f_g = sig[:, H:2 * H]
        o_g = sig[:, 3 * H:4 * H]
        # g-gate pre-activation was scaled x2 in prepare_params:
        # tanh(z) = 2*sigmoid(2z) - 1  (no extra EUP push)
        g_g = 2.0 * sig[:, 2 * H:3 * H] - 1.0
        c = f_g * c + i_g * g_g
        h = o_g * jnp.tanh(c)
        hs.append(h)
    all_h = jnp.concatenate(hs, axis=0)      # (T*B, H), t-major

    # ---- MultiheadAttention(query=h_last, key=all_h, value=all_h) ----
    proj = jnp.dot(all_h, w_qkv_t, preferred_element_type=f32) + b_qkv  # (T*B, 3H)
    q = proj[(T - 1) * B:T * B, 0:H]         # (B, H); 1/sqrt(d) folded into W_q/b_q
    k = proj[:, H:2 * H]                     # (T*B, H)
    v = proj[:, 2 * H:3 * H]                 # (T*B, H)

    # scores[t*B+b, head] = sum_{j in head} q[b, j] * k[t*B+b, j]
    q_tiled = jnp.tile(q, (T, 1))                                       # (T*B, H)
    scores = jnp.dot(k * q_tiled, g_mat, preferred_element_type=f32)    # (T*B, nh)

    # Reduction over time = reduce over the T sublane blocks of B rows.
    def time_reduce(a, op):
        r = a[0:B, :]
        for tt in range(1, T):
            r = op(r, a[tt * B:(tt + 1) * B, :])
        return r

    # softmax over time, lane-dense (never slices below full head/lane width)
    m = time_reduce(scores, jnp.maximum)                                # (B, nh)
    ex = jnp.exp(scores - jnp.tile(m, (T, 1)))                          # (T*B, nh)
    denom = time_reduce(ex, jnp.add)                                    # (B, nh)
    inv = pl.reciprocal(denom, approx=True)                             # EUP vrcp
    w_attn = ex * jnp.tile(inv, (T, 1))                                 # (T*B, nh)

    # expand per-head weights back to H lanes, weight V, reduce over time
    w_exp = jnp.dot(w_attn, g_mat_t, preferred_element_type=f32)        # (T*B, H)
    attn = time_reduce(w_exp * v, jnp.add)                              # (B, H)

    # ---- fused out_proj + final Linear, full-tile padded store ----
    out = jnp.dot(attn, w_comb_t, preferred_element_type=f32) + b_out   # (B, OUT_PAD)
    if b_pad > B:
        out = jnp.concatenate(
            [out, jnp.zeros((b_pad - B, out_pad), f32)], axis=0)        # (B_PAD, OUT_PAD)
    out_ref[...] = out.astype(out_ref.dtype)


# -------------------------------------------------------------------- one-time packing
def prepare_params(params, *, input_size, hidden_size, output_size, num_heads=4):
    """One-time parameter packing. Call ONCE; pass the returned slab to every forward."""
    H = hidden_size
    nh = num_heads
    assert H % nh == 0
    d = H // nh
    scale = 1.0 / float(d) ** 0.5
    L = _slab_layout(input_size, hidden_size, output_size, num_heads)

    f32 = jnp.float32
    w_ih = params["w_ih"].astype(f32)                       # (4H, In)
    w_hh = params["w_hh"].astype(f32)                       # (4H, H)
    b_lstm = (params["b_ih"] + params["b_hh"]).astype(f32)  # (4H,)

    # fold x2 into the g-gate rows so the kernel can use tanh(z) = 2*sigmoid(2z) - 1
    gate_scale = jnp.ones((4 * H, 1), f32).at[2 * H:3 * H].set(2.0)
    w_ih = w_ih * gate_scale
    w_hh = w_hh * gate_scale
    b_lstm = b_lstm * gate_scale[:, 0]
    w_ih_t = w_ih.T                                          # (In, 4H)
    w_hh_t = w_hh.T                                          # (H, 4H)

    # attention in_proj: fold 1/sqrt(d) into W_q/b_q, concat Q|K|V
    ipw = params["in_proj_w"].astype(f32)                    # (3H, H)
    ipb = params["in_proj_b"].astype(f32)                    # (3H,)
    w_qkv_t = jnp.concatenate(
        [ipw[0:H].T * scale, ipw[H:2 * H].T, ipw[2 * H:3 * H].T], axis=1)  # (H, 3H)
    b_qkv = jnp.concatenate([ipb[0:H] * scale, ipb[H:2 * H], ipb[2 * H:3 * H]])

    # fold out_proj @ final Linear (no nonlinearity in between)
    lin_w = params["lin_w"].astype(f32)
    w_comb_t = params["out_proj_w"].astype(f32).T @ lin_w.T              # (H, Out)
    b_comb = params["out_proj_b"].astype(f32) @ lin_w.T + params["lin_b"].astype(f32)

    # constant block-diagonal head-grouping matrices (MXU head reduce / expand)
    row = jnp.arange(H)[:, None]
    col = jnp.arange(nh)[None, :]
    g_mat = ((row >= col * d) & (row < (col + 1) * d)).astype(f32)       # (H, nh)
    g_mat_t = g_mat.T                                                    # (nh, H)

    slab = jnp.zeros((L["rows"], L["slab_w"]), f32)
    slab = slab.at[L["r_ih"]:L["r_ih"] + input_size, 0:4 * H].set(w_ih_t)
    slab = slab.at[L["r_hh"]:L["r_hh"] + H, 0:4 * H].set(w_hh_t)
    slab = slab.at[L["r_qkv"]:L["r_qkv"] + H, 0:3 * H].set(w_qkv_t)
    slab = slab.at[L["r_comb"]:L["r_comb"] + H, 0:output_size].set(w_comb_t)
    slab = slab.at[L["r_g"]:L["r_g"] + H, 0:nh].set(g_mat)
    slab = slab.at[L["r_gt"]:L["r_gt"] + nh, 0:H].set(g_mat_t)
    slab = slab.at[L["r_b"], 0:4 * H].set(b_lstm)
    slab = slab.at[L["r_b"] + 1, 0:3 * H].set(b_qkv)
    slab = slab.at[L["r_b"] + 2, 0:output_size].set(b_comb)
    return slab


# ---------------------------------------------------------------------- per-call path
@functools.partial(jax.jit,
                   static_argnames=("input_size", "hidden_size", "output_size",
                                    "num_heads"))
def lstm_model_forward(x, slab, *, input_size, hidden_size, output_size, num_heads=4):
    B, T_full, in_sz = x.shape
    assert in_sz == input_size
    assert T_full >= SEQ_TIME, f"need seq len >= {SEQ_TIME}, got {T_full}"
    H = hidden_size
    T = SEQ_TIME
    L = _slab_layout(input_size, hidden_size, output_size, num_heads)
    b_pad = _round_up(B, 8)

    # x: slice to seq_time, flatten t-major (row = t*B + b)
    x_sl = x[:, :T, :].astype(jnp.float32)
    x_flat = jnp.transpose(x_sl, (1, 0, 2)).reshape(T * B, input_size)

    kernel = functools.partial(
        lstm_attn_kernel,
        hidden_size=H, num_heads=num_heads, seq_time=T, input_size=input_size,
        out_pad=L["out_pad"], b_pad=b_pad,
        r_ih=L["r_ih"], r_hh=L["r_hh"], r_qkv=L["r_qkv"], r_comb=L["r_comb"],
        r_g=L["r_g"], r_gt=L["r_gt"], r_b=L["r_b"],
    )
    vmem = pl.BlockSpec(memory_space=pltpu.MemorySpace.VMEM)
    # Single grid point: entire problem (~80 KiB) sits in VMEM with 2 input DMAs.
    out_padded = pl.pallas_call(
        kernel,
        out_shape=jax.ShapeDtypeStruct((b_pad, L["out_pad"]), jnp.float32),
        in_specs=[vmem, vmem],
        out_specs=vmem,
    )(x_flat, slab)
    return out_padded[:B, :output_size]


# --------------------------------------------------------------------------- init/test
def init_params(key, input_size, hidden_size, output_size):
    H = hidden_size
    ks = jax.random.split(key, 8)
    bound = 1.0 / float(H) ** 0.5
    return {
        "w_ih": jax.random.uniform(ks[0], (4 * H, input_size), jnp.float32, -bound, bound),
        "w_hh": jax.random.uniform(ks[1], (4 * H, H), jnp.float32, -bound, bound),
        "b_ih": jax.random.uniform(ks[2], (4 * H,), jnp.float32, -bound, bound),
        "b_hh": jax.random.uniform(ks[3], (4 * H,), jnp.float32, -bound, bound),
        "in_proj_w": jax.random.uniform(ks[4], (3 * H, H), jnp.float32, -0.1, 0.1),
        "in_proj_b": jnp.zeros((3 * H,), jnp.float32),
        "out_proj_w": jax.random.uniform(ks[5], (H, H), jnp.float32, -0.1, 0.1),
        "out_proj_b": jnp.zeros((H,), jnp.float32),
        "lin_w": jax.random.uniform(ks[6], (output_size, H), jnp.float32, -bound, bound),
        "lin_b": jax.random.uniform(ks[7], (output_size,), jnp.float32, -bound, bound),
    }


if __name__ == "__main__":
    # Small shapes consistent with the module:
    #   batch=2, total seq=8 (sliced to seq_time=4), input_size=8,
    #   hidden_size=32 (divisible by num_heads=4), output_size=4.
    B, T, INPUT_SIZE, HIDDEN_SIZE, OUTPUT_SIZE = 2, 8, 8, 32, 4

    key = jax.random.PRNGKey(0)
    k_x, k_p = jax.random.split(key)
    x = jax.random.normal(k_x, (B, T, INPUT_SIZE), jnp.float32)
    params = init_params(k_p, INPUT_SIZE, HIDDEN_SIZE, OUTPUT_SIZE)

    # One-time packing (off the hot path).
    slab = jax.block_until_ready(
        prepare_params(params, input_size=INPUT_SIZE, hidden_size=HIDDEN_SIZE,
                       output_size=OUTPUT_SIZE))

    out = lstm_model_forward(
        x, slab, input_size=INPUT_SIZE, hidden_size=HIDDEN_SIZE,
        output_size=OUTPUT_SIZE)
    out = jax.block_until_ready(out)
    assert out.shape == (B, OUTPUT_SIZE)
    assert bool(jnp.all(jnp.isfinite(out)))
    print("KERNEL_OK")
</pallas_src>

<mosaic_0001>
module attributes {stable_mosaic.version = 11 : i64} {
  func.func @lstm_attn_kernel(%arg0: memref<8x8xf32, #tpu.memory_space<vmem>>, %arg1: memref<152x128xf32, #tpu.memory_space<vmem>>, %arg2: memref<8x128xf32, #tpu.memory_space<vmem>>) attributes {dimension_semantics = [], scalar_prefetch = 0 : i64, scratch_operands = 0 : i64, tpu.core_type = #tpu.core_type<tc>} {
    %c0 = arith.constant 0 : index
    %c0_0 = arith.constant 0 : index
    %0 = vector.load %arg1[%c0, %c0_0] : memref<152x128xf32, #tpu.memory_space<vmem>>, vector<8x128xf32>
    %c8 = arith.constant 8 : index
    %c0_1 = arith.constant 0 : index
    %1 = vector.load %arg1[%c8, %c0_1] : memref<152x128xf32, #tpu.memory_space<vmem>>, vector<32x128xf32>
    %c40 = arith.constant 40 : index
    %c0_2 = arith.constant 0 : index
    %2 = vector.load %arg1[%c40, %c0_2] : memref<152x128xf32, #tpu.memory_space<vmem>>, vector<32x96xf32>
    %c72 = arith.constant 72 : index
    %c0_3 = arith.constant 0 : index
    %3 = vector.load %arg1[%c72, %c0_3] : memref<152x128xf32, #tpu.memory_space<vmem>>, vector<32x128xf32>
    %c104 = arith.constant 104 : index
    %c0_4 = arith.constant 0 : index
    %4 = vector.load %arg1[%c104, %c0_4] : memref<152x128xf32, #tpu.memory_space<vmem>>, vector<32x4xf32>
    %c136 = arith.constant 136 : index
    %c0_5 = arith.constant 0 : index
    %5 = vector.load %arg1[%c136, %c0_5] : memref<152x128xf32, #tpu.memory_space<vmem>>, vector<4x32xf32>
    %c144 = arith.constant 144 : index
    %c0_6 = arith.constant 0 : index
    %6 = vector.load %arg1[%c144, %c0_6] : memref<152x128xf32, #tpu.memory_space<vmem>>, vector<8x128xf32>
    %7 = vector.extract_strided_slice %6 {offsets = [0, 0], sizes = [1, 128], strides = [1, 1]} : vector<8x128xf32> to vector<1x128xf32>
    %8 = vector.extract_strided_slice %6 {offsets = [1, 0], sizes = [1, 96], strides = [1, 1]} : vector<8x128xf32> to vector<1x96xf32>
    %9 = vector.extract_strided_slice %6 {offsets = [2, 0], sizes = [1, 128], strides = [1, 1]} : vector<8x128xf32> to vector<1x128xf32>
    %c0_7 = arith.constant 0 : index
    %c0_8 = arith.constant 0 : index
    %10 = vector.load %arg0[%c0_7, %c0_8] : memref<8x8xf32, #tpu.memory_space<vmem>>, vector<8x8xf32>
    %cst = arith.constant dense<0.000000e+00> : vector<8x128xf32>
    %11 = tpu.matmul %10, %0, %cst {dimension_numbers = #tpu.dot_dimension_numbers<[1], [0], [0], [1], [0, 0, 1, 1], [], []>} : vector<8x8xf32>, vector<8x128xf32>, vector<8x128xf32> -> vector<8x128xf32>
    %12 = vector.broadcast %7 : vector<1x128xf32> to vector<8x128xf32>
    %13 = arith.addf %11, %12 : vector<8x128xf32>
    %cst_9 = arith.constant 0.000000e+00 : f32
    %14 = vector.broadcast %cst_9 : f32 to vector<2x32xf32>
    %cst_10 = arith.constant 0.000000e+00 : f32
    %15 = vector.broadcast %cst_10 : f32 to vector<2x32xf32>
    %16 = vector.extract_strided_slice %13 {offsets = [0, 0], sizes = [2, 128], strides = [1, 1]} : vector<8x128xf32> to vector<2x128xf32>
    %cst_11 = arith.constant dense<0.000000e+00> : vector<2x128xf32>
    %17 = tpu.matmul %14, %1, %cst_11 {dimension_numbers = #tpu.dot_dimension_numbers<[1], [0], [0], [1], [0, 0, 1, 1], [], []>} : vector<2x32xf32>, vector<32x128xf32>, vector<2x128xf32> -> vector<2x128xf32>
    %18 = arith.addf %16, %17 : vector<2x128xf32>
    %19 = arith.negf %18 : vector<2x128xf32>
    %20 = math.exp %19 : vector<2x128xf32>
    %cst_12 = arith.constant 1.000000e+00 : f32
    %21 = vector.broadcast %cst_12 : f32 to vector<2x128xf32>
    %22 = arith.addf %21, %20 : vector<2x128xf32>
    %23 = arith.divf %21, %22 : vector<2x128xf32>
    %24 = vector.extract_strided_slice %23 {offsets = [0, 0], sizes = [2, 32], strides = [1, 1]} : vector<2x128xf32> to vector<2x32xf32>
    %25 = vector.extract_strided_slice %23 {offsets = [0, 32], sizes = [2, 32], strides = [1, 1]} : vector<2x128xf32> to vector<2x32xf32>
    %26 = vector.extract_strided_slice %23 {offsets = [0, 96], sizes = [2, 32], strides = [1, 1]} : vector<2x128xf32> to vector<2x32xf32>
    %27 = vector.extract_strided_slice %23 {offsets = [0, 64], sizes = [2, 32], strides = [1, 1]} : vector<2x128xf32> to vector<2x32xf32>
    %cst_13 = arith.constant 2.000000e+00 : f32
    %28 = vector.broadcast %cst_13 : f32 to vector<2x32xf32>
    %29 = arith.mulf %28, %27 : vector<2x32xf32>
    %cst_14 = arith.constant 1.000000e+00 : f32
    %30 = vector.broadcast %cst_14 : f32 to vector<2x32xf32>
    %31 = arith.subf %29, %30 : vector<2x32xf32>
    %32 = arith.mulf %25, %15 : vector<2x32xf32>
    %33 = arith.mulf %24, %31 : vector<2x32xf32>
    %34 = arith.addf %32, %33 : vector<2x32xf32>
    %35 = math.tanh %34 : vector<2x32xf32>
    %36 = arith.mulf %26, %35 : vector<2x32xf32>
    %37 = vector.extract_strided_slice %13 {offsets = [2, 0], sizes = [2, 128], strides = [1, 1]} : vector<8x128xf32> to vector<2x128xf32>
    %cst_15 = arith.constant dense<0.000000e+00> : vector<2x128xf32>
    %38 = tpu.matmul %36, %1, %cst_15 {dimension_numbers = #tpu.dot_dimension_numbers<[1], [0], [0], [1], [0, 0, 1, 1], [], []>} : vector<2x32xf32>, vector<32x128xf32>, vector<2x128xf32> -> vector<2x128xf32>
    %39 = arith.addf %37, %38 : vector<2x128xf32>
    %40 = arith.negf %39 : vector<2x128xf32>
    %41 = math.exp %40 : vector<2x128xf32>
    %cst_16 = arith.constant 1.000000e+00 : f32
    %42 = vector.broadcast %cst_16 : f32 to vector<2x128xf32>
    %43 = arith.addf %42, %41 : vector<2x128xf32>
    %44 = arith.divf %42, %43 : vector<2x128xf32>
    %45 = vector.extract_strided_slice %44 {offsets = [0, 0], sizes = [2, 32], strides = [1, 1]} : vector<2x128xf32> to vector<2x32xf32>
    %46 = vector.extract_strided_slice %44 {offsets = [0, 32], sizes = [2, 32], strides = [1, 1]} : vector<2x128xf32> to vector<2x32xf32>
    %47 = vector.extract_strided_slice %44 {offsets = [0, 96], sizes = [2, 32], strides = [1, 1]} : vector<2x128xf32> to vector<2x32xf32>
    %48 = vector.extract_strided_slice %44 {offsets = [0, 64], sizes = [2, 32], strides = [1, 1]} : vector<2x128xf32> to vector<2x32xf32>
    %cst_17 = arith.constant 2.000000e+00 : f32
    %49 = vector.broadcast %cst_17 : f32 to vector<2x32xf32>
    %50 = arith.mulf %49, %48 : vector<2x32xf32>
    %cst_18 = arith.constant 1.000000e+00 : f32
    %51 = vector.broadcast %cst_18 : f32 to vector<2x32xf32>
    %52 = arith.subf %50, %51 : vector<2x32xf32>
    %53 = arith.mulf %46, %34 : vector<2x32xf32>
    %54 = arith.mulf %45, %52 : vector<2x32xf32>
    %55 = arith.addf %53, %54 : vector<2x32xf32>
    %56 = math.tanh %55 : vector<2x32xf32>
    %57 = arith.mulf %47, %56 : vector<2x32xf32>
    %58 = vector.extract_strided_slice %13 {offsets = [4, 0], sizes = [2, 128], strides = [1, 1]} : vector<8x128xf32> to vector<2x128xf32>
    %cst_19 = arith.constant dense<0.000000e+00> : vector<2x128xf32>
    %59 = tpu.matmul %57, %1, %cst_19 {dimension_numbers = #tpu.dot_dimension_numbers<[1], [0], [0], [1], [0, 0, 1, 1], [], []>} : vector<2x32xf32>, vector<32x128xf32>, vector<2x128xf32> -> vector<2x128xf32>
    %60 = arith.addf %58, %59 : vector<2x128xf32>
    %61 = arith.negf %60 : vector<2x128xf32>
    %62 = math.exp %61 : vector<2x128xf32>
    %cst_20 = arith.constant 1.000000e+00 : f32
    %63 = vector.broadcast %cst_20 : f32 to vector<2x128xf32>
    %64 = arith.addf %63, %62 : vector<2x128xf32>
    %65 = arith.divf %63, %64 : vector<2x128xf32>
    %66 = vector.extract_strided_slice %65 {offsets = [0, 0], sizes = [2, 32], strides = [1, 1]} : vector<2x128xf32> to vector<2x32xf32>
    %67 = vector.extract_strided_slice %65 {offsets = [0, 32], sizes = [2, 32], strides = [1, 1]} : vector<2x128xf32> to vector<2x32xf32>
    %68 = vector.extract_strided_slice %65 {offsets = [0, 96], sizes = [2, 32], strides = [1, 1]} : vector<2x128xf32> to vector<2x32xf32>
    %69 = vector.extract_strided_slice %65 {offsets = [0, 64], sizes = [2, 32], strides = [1, 1]} : vector<2x128xf32> to vector<2x32xf32>
    %cst_21 = arith.constant 2.000000e+00 : f32
    %70 = vector.broadcast %cst_21 : f32 to vector<2x32xf32>
    %71 = arith.mulf %70, %69 : vector<2x32xf32>
    %cst_22 = arith.constant 1.000000e+00 : f32
    %72 = vector.broadcast %cst_22 : f32 to vector<2x32xf32>
    %73 = arith.subf %71, %72 : vector<2x32xf32>
    %74 = arith.mulf %67, %55 : vector<2x32xf32>
    %75 = arith.mulf %66, %73 : vector<2x32xf32>
    %76 = arith.addf %74, %75 : vector<2x32xf32>
    %77 = math.tanh %76 : vector<2x32xf32>
    %78 = arith.mulf %68, %77 : vector<2x32xf32>
    %79 = vector.extract_strided_slice %13 {offsets = [6, 0], sizes = [2, 128], strides = [1, 1]} : vector<8x128xf32> to vector<2x128xf32>
    %cst_23 = arith.constant dense<0.000000e+00> : vector<2x128xf32>
    %80 = tpu.matmul %78, %1, %cst_23 {dimension_numbers = #tpu.dot_dimension_numbers<[1], [0], [0], [1], [0, 0, 1, 1], [], []>} : vector<2x32xf32>, vector<32x128xf32>, vector<2x128xf32> -> vector<2x128xf32>
    %81 = arith.addf %79, %80 : vector<2x128xf32>
    %82 = arith.negf %81 : vector<2x128xf32>
    %83 = math.exp %82 : vector<2x128xf32>
    %cst_24 = arith.constant 1.000000e+00 : f32
    %84 = vector.broadcast %cst_24 : f32 to vector<2x128xf32>
    %85 = arith.addf %84, %83 : vector<2x128xf32>
    %86 = arith.divf %84, %85 : vector<2x128xf32>
    %87 = vector.extract_strided_slice %86 {offsets = [0, 0], sizes = [2, 32], strides = [1, 1]} : vector<2x128xf32> to vector<2x32xf32>
    %88 = vector.extract_strided_slice %86 {offsets = [0, 32], sizes = [2, 32], strides = [1, 1]} : vector<2x128xf32> to vector<2x32xf32>
    %89 = vector.extract_strided_slice %86 {offsets = [0, 96], sizes = [2, 32], strides = [1, 1]} : vector<2x128xf32> to vector<2x32xf32>
    %90 = vector.extract_strided_slice %86 {offsets = [0, 64], sizes = [2, 32], strides = [1, 1]} : vector<2x128xf32> to vector<2x32xf32>
    %cst_25 = arith.constant 2.000000e+00 : f32
    %91 = vector.broadcast %cst_25 : f32 to vector<2x32xf32>
    %92 = arith.mulf %91, %90 : vector<2x32xf32>
    %cst_26 = arith.constant 1.000000e+00 : f32
    %93 = vector.broadcast %cst_26 : f32 to vector<2x32xf32>
    %94 = arith.subf %92, %93 : vector<2x32xf32>
    %95 = arith.mulf %88, %76 : vector<2x32xf32>
    %96 = arith.mulf %87, %94 : vector<2x32xf32>
    %97 = arith.addf %95, %96 : vector<2x32xf32>
    %98 = math.tanh %97 : vector<2x32xf32>
    %99 = arith.mulf %89, %98 : vector<2x32xf32>
    %100 = tpu.concatenate %36, %57, %78, %99 in 0 : vector<2x32xf32>, vector<2x32xf32>, vector<2x32xf32>, vector<2x32xf32> -> vector<8x32xf32>
    %cst_27 = arith.constant dense<0.000000e+00> : vector<8x96xf32>
    %101 = tpu.matmul %100, %2, %cst_27 {dimension_numbers = #tpu.dot_dimension_numbers<[1], [0], [0], [1], [0, 0, 1, 1], [], []>} : vector<8x32xf32>, vector<32x96xf32>, vector<8x96xf32> -> vector<8x96xf32>
    %102 = vector.broadcast %8 : vector<1x96xf32> to vector<8x96xf32>
    %103 = arith.addf %101, %102 : vector<8x96xf32>
    %104 = vector.extract_strided_slice %103 {offsets = [6, 0], sizes = [2, 32], strides = [1, 1]} : vector<8x96xf32> to vector<2x32xf32>
    %105 = vector.extract_strided_slice %103 {offsets = [0, 32], sizes = [8, 32], strides = [1, 1]} : vector<8x96xf32> to vector<8x32xf32>
    %106 = vector.extract_strided_slice %103 {offsets = [0, 64], sizes = [8, 32], strides = [1, 1]} : vector<8x96xf32> to vector<8x32xf32>
    %107 = tpu.concatenate %104, %104, %104, %104 in 0 : vector<2x32xf32>, vector<2x32xf32>, vector<2x32xf32>, vector<2x32xf32> -> vector<8x32xf32>
    %108 = arith.mulf %105, %107 : vector<8x32xf32>
    %cst_28 = arith.constant dense<0.000000e+00> : vector<8x4xf32>
    %109 = tpu.matmul %108, %4, %cst_28 {dimension_numbers = #tpu.dot_dimension_numbers<[1], [0], [0], [1], [0, 0, 1, 1], [], []>} : vector<8x32xf32>, vector<32x4xf32>, vector<8x4xf32> -> vector<8x4xf32>
    %110 = vector.extract_strided_slice %109 {offsets = [0, 0], sizes = [2, 4], strides = [1, 1]} : vector<8x4xf32> to vector<2x4xf32>
    %111 = vector.extract_strided_slice %109 {offsets = [2, 0], sizes = [2, 4], strides = [1, 1]} : vector<8x4xf32> to vector<2x4xf32>
    %112 = arith.maximumf %110, %111 : vector<2x4xf32>
    %113 = vector.extract_strided_slice %109 {offsets = [4, 0], sizes = [2, 4], strides = [1, 1]} : vector<8x4xf32> to vector<2x4xf32>
    %114 = arith.maximumf %112, %113 : vector<2x4xf32>
    %115 = vector.extract_strided_slice %109 {offsets = [6, 0], sizes = [2, 4], strides = [1, 1]} : vector<8x4xf32> to vector<2x4xf32>
    %116 = arith.maximumf %114, %115 : vector<2x4xf32>
    %117 = tpu.concatenate %116, %116, %116, %116 in 0 : vector<2x4xf32>, vector<2x4xf32>, vector<2x4xf32>, vector<2x4xf32> -> vector<8x4xf32>
    %118 = arith.subf %109, %117 : vector<8x4xf32>
    %119 = math.exp %118 : vector<8x4xf32>
    %120 = vector.extract_strided_slice %119 {offsets = [0, 0], sizes = [2, 4], strides = [1, 1]} : vector<8x4xf32> to vector<2x4xf32>
    %121 = vector.extract_strided_slice %119 {offsets = [2, 0], sizes = [2, 4], strides = [1, 1]} : vector<8x4xf32> to vector<2x4xf32>
    %122 = arith.addf %120, %121 : vector<2x4xf32>
    %123 = vector.extract_strided_slice %119 {offsets = [4, 0], sizes = [2, 4], strides = [1, 1]} : vector<8x4xf32> to vector<2x4xf32>
    %124 = arith.addf %122, %123 : vector<2x4xf32>
    %125 = vector.extract_strided_slice %119 {offsets = [6, 0], sizes = [2, 4], strides = [1, 1]} : vector<8x4xf32> to vector<2x4xf32>
    %126 = arith.addf %124, %125 : vector<2x4xf32>
    %127 = tpu.reciprocal %126 {approx = true} : vector<2x4xf32> -> vector<2x4xf32>
    %128 = tpu.concatenate %127, %127, %127, %127 in 0 : vector<2x4xf32>, vector<2x4xf32>, vector<2x4xf32>, vector<2x4xf32> -> vector<8x4xf32>
    %129 = arith.mulf %119, %128 : vector<8x4xf32>
    %cst_29 = arith.constant dense<0.000000e+00> : vector<8x32xf32>
    %130 = tpu.matmul %129, %5, %cst_29 {dimension_numbers = #tpu.dot_dimension_numbers<[1], [0], [0], [1], [0, 0, 1, 1], [], []>} : vector<8x4xf32>, vector<4x32xf32>, vector<8x32xf32> -> vector<8x32xf32>
    %131 = arith.mulf %130, %106 : vector<8x32xf32>
    %132 = vector.extract_strided_slice %131 {offsets = [0, 0], sizes = [2, 32], strides = [1, 1]} : vector<8x32xf32> to vector<2x32xf32>
    %133 = vector.extract_strided_slice %131 {offsets = [2, 0], sizes = [2, 32], strides = [1, 1]} : vector<8x32xf32> to vector<2x32xf32>
    %134 = arith.addf %132, %133 : vector<2x32xf32>
    %135 = vector.extract_strided_slice %131 {offsets = [4, 0], sizes = [2, 32], strides = [1, 1]} : vector<8x32xf32> to vector<2x32xf32>
    %136 = arith.addf %134, %135 : vector<2x32xf32>
    %137 = vector.extract_strided_slice %131 {offsets = [6, 0], sizes = [2, 32], strides = [1, 1]} : vector<8x32xf32> to vector<2x32xf32>
    %138 = arith.addf %136, %137 : vector<2x32xf32>
    %cst_30 = arith.constant dense<0.000000e+00> : vector<2x128xf32>
    %139 = tpu.matmul %138, %3, %cst_30 {dimension_numbers = #tpu.dot_dimension_numbers<[1], [0], [0], [1], [0, 0, 1, 1], [], []>} : vector<2x32xf32>, vector<32x128xf32>, vector<2x128xf32> -> vector<2x128xf32>
    %140 = vector.broadcast %9 : vector<1x128xf32> to vector<2x128xf32>
    %141 = arith.addf %139, %140 : vector<2x128xf32>
    %cst_31 = arith.constant 0.000000e+00 : f32
    %142 = vector.broadcast %cst_31 : f32 to vector<6x128xf32>
    %143 = tpu.concatenate %141, %142 in 0 : vector<2x128xf32>, vector<6x128xf32> -> vector<8x128xf32>
    %c0_32 = arith.constant 0 : index
    %c0_33 = arith.constant 0 : index
    %144 = vector.load %arg2[%c0_32, %c0_33] : memref<8x128xf32, #tpu.memory_space<vmem>>, vector<8x128xf32>
    tpu.vector_store %arg2[%c0_32, %c0_33], %143 {strides = array<i32>} : memref<8x128xf32, #tpu.memory_space<vmem>>, vector<8x128xf32>,
    return
  }
}

</mosaic_0001>

<llo_original>
// kernel: lstm_model_forward.1
$region0: #{lstm_model_forward.1}
  #allocation0 [shape = 'u32[]', space=smem, size = 0x4, offset = 0x4, fixed_abs, tag = 'smem constant byte address 0x4 - core index']
  #allocation1 [shape = 'u32[144,128]{1,0:T(1,128)}', space=vmem, size = 0x12000, scoped, tag = 'internal scratch']
  %s0 = inlined_call_operand.vmem [shape: f32[8,8], index: 0, kind: input, shape index: {}]
  %s1 = inlined_call_operand.hbm [shape: f32[152,128], index: 1, kind: input, shape index: {}]
  %s2 = inlined_call_operand.vmem [shape: f32[8,128], index: 2, kind: output, shape index: {}]
  %s3 = sld [smem:[#allocation0]]
  $region22: #{lstm_model_forward.1} parent=0
    _
  %s5 = ssub.s32 1, %s3
  %s6 = scalar_select 0, %s5, %s3
  $region1: #{lstm_model_forward.1} parent=0
    #allocation2 [shape = 'u8[77824]{0}', space=vmem, size = 0x13000, scoped, tag = 'input window, operand 1, single buffered']
    #allocation3 [shape = 's32[1]{0}', space=sflag, size = 0x4, scoped, tag = 'scoped memory for lstm_model_forward.1']
    %7 = vsyncpa [#allocation3], 0
    // Predicated region
    $region2: #{lstm_model_forward.1} parent=1 // pred_check
      _
    $region3: #{lstm_model_forward.1} parent=1 // pred_check_branch
      %9 = sbr.rel (0) target = $region5
    $region4: #{lstm_model_forward.1} parent=1 // pred_region
      _
    $region5: #{lstm_model_forward.1} parent=1 // pred_fallthru
      _
    // Predicated region
    $region6: #{lstm_model_forward.1} parent=1 // pred_check
      _
    $region7: #{lstm_model_forward.1} parent=1 // pred_check_branch
      %11 = sbr.rel (0) target = $region9
    $region8: #{lstm_model_forward.1} parent=1 // pred_region
      %s13 = ssub.s32 2432, 2432
      %14 = vsyncadd [#allocation3], %s13
      %s15 = sshll.u32 [#allocation2], 4
      %s16 = int_to_ptr.vmem [resolvable:$true] %s15
      %21 = dma.hbm_to_vmem [thread:$0]  %s1, 2432, %s16, [#allocation3], 128, 128, 8
    $region9: #{lstm_model_forward.1} parent=1 // pred_fallthru
      _
    // Predicated region
    $region10: #{lstm_model_forward.1} parent=1 // pred_check
      _
    $region11: #{lstm_model_forward.1} parent=1 // pred_check_branch
      %23 = sbr.rel (0) target = $region13
    $region12: #{lstm_model_forward.1} parent=1 // pred_region
      %24 = dma.done [#allocation3], 2432
    $region13: #{lstm_model_forward.1} parent=1 // pred_fallthru
      _
    %v25 = vld [vmem:[#allocation2] sm:$0xff]
    %v26 = vld [vmem:[#allocation2 + $0x8] sm:$0xff]
    %v27 = vld [vmem:[#allocation2 + $0x10] sm:$0xff]
    %v28 = vld [vmem:[#allocation2 + $0x18] sm:$0xff]
    %v29 = vld [vmem:[#allocation2 + $0x20] sm:$0xff]
    %v30 = vld [vmem:[#allocation2 + $0x28] sm:$0xff]
    %v31 = vld [vmem:[#allocation2 + $0x30] sm:$0xff]
    %v32 = vld [vmem:[#allocation2 + $0x38] sm:$0xff]
    %v33 = vld [vmem:[#allocation2 + $0x40] sm:$0xff]
    %v34 = vld [vmem:[#allocation2 + $0x48] sm:$0xff]
    %v35 = vld [vmem:[#allocation2 + $0x50] sm:$0xff]
    %v36 = vld [vmem:[#allocation2 + $0x58] sm:$0xff]
    %v37 = vld [vmem:[#allocation2 + $0x60] sm:$0xff]
    %v38 = vld [vmem:[#allocation2 + $0x68] sm:$0xff]
    %v39 = vld [vmem:[#allocation2 + $0x70] sm:$0xff]
    %v40 = vld [vmem:[#allocation2 + $0x78] sm:$0xff]
    %v41 = vld [vmem:[#allocation2 + $0x80] sm:$0xff]
    %v42 = vld [vmem:[#allocation2 + $0x88] sm:$0xf]
    %v43 = vld [vmem:[#allocation2 + $0x90] sm:$0xff]
    %v44 = vld [vmem:[%s0] sm:$0xff]
    %v45 = vlaneseq
    %v46 = vshrl.u32 %v45, 7
    %v47 = vsub.s32 0, %v46
    %v48 = vrot.slane %v43, %v47
    %vm49 = vcmask 64512
    %v51 = vsel %vm49, %v44, 0
    %53 = vmatprep.subr.mxu0 0.0
    %54 = vmatpush1.msra.mxu0 0.0
    %55 = vmatprep.subr.mxu0 0.0
    %56 = vmatpush1.msra.mxu0 0.0
    %57 = vmatprep.subr.mxu0 0.0
    %58 = vmatpush1.msra.mxu0 0.0
    %59 = vmatprep.subr.mxu0 0.0
    %60 = vmatpush1.msra.mxu0 0.0
    %61 = vmatprep.subr.mxu0 0.0
    %62 = vmatpush1.msra.mxu0 0.0
    %63 = vmatprep.subr.mxu0 0.0
    %64 = vmatpush1.msra.mxu0 0.0
    %65 = vmatprep.subr.mxu0 0.0
    %66 = vmatpush1.msra.mxu0 0.0
    %67 = vmatprep.subr.mxu0 0.0
    %68 = vmatpush1.msra.mxu0 0.0
    %69 = vmatprep.subr.mxu0 0.0
    %70 = vmatpush1.msra.mxu0 0.0
    %71 = vmatprep.subr.mxu0 0.0
    %72 = vmatpush1.msra.mxu0 0.0
    %73 = vmatprep.subr.mxu0 0.0
    %74 = vmatpush1.msra.mxu0 0.0
    %75 = vmatprep.subr.mxu0 0.0
    %76 = vmatpush1.msra.mxu0 0.0
    %77 = vmatprep.subr.mxu0 0.0
    %78 = vmatpush1.msra.mxu0 0.0
    %79 = vmatprep.subr.mxu0 0.0
    %80 = vmatpush1.msra.mxu0 0.0
    %81 = vmatprep.subr.mxu0 0.0
    %82 = vmatpush1.msra.mxu0 0.0
    %83 = vmatprep.subr.mxu0 0.0
    %84 = vmatpush1.msra.mxu0 %v25
    %85 = vmatprep.subr.mxu0 0.0
    %86 = vmatpush2.msra.mxu0 0.0
    %87 = vmatprep.subr.mxu0 0.0
    %88 = vmatpush2.msra.mxu0 0.0
    %89 = vmatprep.subr.mxu0 0.0
    %90 = vmatpush2.msra.mxu0 0.0
    %91 = vmatprep.subr.mxu0 0.0
    %92 = vmatpush2.msra.mxu0 0.0
    %93 = vmatprep.subr.mxu0 0.0
    %94 = vmatpush2.msra.mxu0 0.0
    %95 = vmatprep.subr.mxu0 0.0
    %96 = vmatpush2.msra.mxu0 0.0
    %97 = vmatprep.subr.mxu0 0.0
    %98 = vmatpush2.msra.mxu0 0.0
    %99 = vmatprep.subr.mxu0 0.0
    %100 = vmatpush2.msra.mxu0 0.0
    %101 = vmatprep.subr.mxu0 0.0
    %102 = vmatpush2.msra.mxu0 0.0
    %103 = vmatprep.subr.mxu0 0.0
    %104 = vmatpush2.msra.mxu0 0.0
    %105 = vmatprep.subr.mxu0 0.0
    %106 = vmatpush2.msra.mxu0 0.0
    %107 = vmatprep.subr.mxu0 0.0
    %108 = vmatpush2.msra.mxu0 0.0
    %109 = vmatprep.subr.mxu0 0.0
    %110 = vmatpush2.msra.mxu0 0.0
    %111 = vmatprep.subr.mxu0 0.0
    %112 = vmatpush2.msra.mxu0 0.0
    %113 = vmatprep.subr.mxu0 0.0
    %114 = vmatpush2.msra.mxu0 0.0
    %115 = vmatprep.subr.mxu0 0.0
    %116 = vmatpush2.msra.mxu0 0.0
    %117 = vmatprep.mubr.f32.mxu0 0.0
    %118 = vmatmul.mubr.f32.gmra.mxu0 %v51
    %v119 = vpop.f32.mrf.mxu0
    %v120 = vadd.f32 %v48, %v119
    %v121 = vpop.f32.mrf.mxu0
    %122 = vdwg.mxu0
    %vm123 = vcmask 261120
    %v125 = vsel %vm123, 0.0, 0
    %127 = vmatprep.subr.mxu0 0.0
    %128 = vmatpush1.msra.mxu0 0.0
    %129 = vmatprep.subr.mxu0 0.0
    %130 = vmatpush1.msra.mxu0 0.0
    %131 = vmatprep.subr.mxu0 0.0
    %132 = vmatpush1.msra.mxu0 0.0
    %133 = vmatprep.subr.mxu0 0.0
    %134 = vmatpush1.msra.mxu0 0.0
    %135 = vmatprep.subr.mxu0 0.0
    %136 = vmatpush1.msra.mxu0 0.0
    %137 = vmatprep.subr.mxu0 0.0
    %138 = vmatpush1.msra.mxu0 0.0
    %139 = vmatprep.subr.mxu0 0.0
    %140 = vmatpush1.msra.mxu0 0.0
    %141 = vmatprep.subr.mxu0 0.0
    %142 = vmatpush1.msra.mxu0 0.0
    %143 = vmatprep.subr.mxu0 0.0
    %144 = vmatpush1.msra.mxu0 0.0
    %145 = vmatprep.subr.mxu0 0.0
    %146 = vmatpush1.msra.mxu0 0.0
    %147 = vmatprep.subr.mxu0 0.0
    %148 = vmatpush1.msra.mxu0 0.0
    %149 = vmatprep.subr.mxu0 0.0
    %150 = vmatpush1.msra.mxu0 0.0
    %151 = vmatprep.subr.mxu0 0.0
    %152 = vmatpush1.msra.mxu0 %v29
    %153 = vmatprep.subr.mxu0 0.0
    %154 = vmatpush1.msra.mxu0 %v28
    %155 = vmatprep.subr.mxu0 0.0
    %156 = vmatpush1.msra.mxu0 %v27
    %157 = vmatprep.subr.mxu0 0.0
    %158 = vmatpush1.msra.mxu0 %v26
    %159 = vmatprep.subr.mxu0 0.0
    %160 = vmatpush2.msra.mxu0 0.0
    %161 = vmatprep.subr.mxu0 0.0
    %162 = vmatpush2.msra.mxu0 0.0
    %163 = vmatprep.subr.mxu0 0.0
    %164 = vmatpush2.msra.mxu0 0.0
    %165 = vmatprep.subr.mxu0 0.0
    %166 = vmatpush2.msra.mxu0 0.0
    %167 = vmatprep.subr.mxu0 0.0
    %168 = vmatpush2.msra.mxu0 0.0
    %169 = vmatprep.subr.mxu0 0.0
    %170 = vmatpush2.msra.mxu0 0.0
    %171 = vmatprep.subr.mxu0 0.0
    %172 = vmatpush2.msra.mxu0 0.0
    %173 = vmatprep.subr.mxu0 0.0
    %174 = vmatpush2.msra.mxu0 0.0
    %175 = vmatprep.subr.mxu0 0.0
    %176 = vmatpush2.msra.mxu0 0.0
    %177 = vmatprep.subr.mxu0 0.0
    %178 = vmatpush2.msra.mxu0 0.0
    %179 = vmatprep.subr.mxu0 0.0
    %180 = vmatpush2.msra.mxu0 0.0
    %181 = vmatprep.subr.mxu0 0.0
    %182 = vmatpush2.msra.mxu0 0.0
    %183 = vmatprep.subr.mxu0 0.0
    %184 = vmatpush2.msra.mxu0 0.0
    %185 = vmatprep.subr.mxu0 0.0
    %186 = vmatpush2.msra.mxu0 0.0
    %187 = vmatprep.subr.mxu0 0.0
    %188 = vmatpush2.msra.mxu0 0.0
    %189 = vmatprep.subr.mxu0 0.0
    %190 = vmatpush2.msra.mxu0 0.0
    %191 = vmatprep.mubr.f32.mxu0 0.0
    %192 = vmatmul.mubr.f32.gmra.mxu0 %v125
    %v193 = vpop.f32.mrf.mxu0
    %v194 = vadd.f32 0.0, %v193
    %v195 = vpop.f32.mrf.mxu0
    %196 = vdwg.mxu0
    %v197 = vadd.f32 %v120, %v194
    %v198 = vxor.u32 %v197, 2147483648
    %v199 = vmul.f32 %v198, 1.442695
    %v200 = vpow.pop %v199
    %v201 = vadd.f32 %v200, 1.0
    %v202 = vrcp.pop %v201
    %v203 = vmul.f32 1.0, %v202
    %v204 = vmul.f32 %v203, 2.0
    %v205 = vsub.f32 %v204, 1.0
    %v206 = vmul.f32 %v203, 0.0
    %208 = vrot.lane.b32.xlu0 %v205, 64
    %v209 = vpop.permute.xlu0 %208
    %v211 = vmul.f32 %v203, %v209
    %213 = vrot.lane.b32.xlu0 %v211, 32
    %v214 = vpop.permute.xlu0 %213
    %v216 = vadd.f32 %v206, %v214
    %v217 = vtanh.pop %v216
    %219 = vrot.lane.b32.xlu0 %v217, 64
    %v220 = vpop.permute.xlu0 %219
    %v222 = vmul.f32 %v203, %v220
    %224 = vrot.lane.b32.xlu0 %v222, 32
    %v225 = vpop.permute.xlu0 %224
    %v226 = vsel %vm123, %v225, 0
    %228 = vmatprep.subr.mxu0 0.0
    %229 = vmatpush1.msra.mxu0 0.0
    %230 = vmatprep.subr.mxu0 0.0
    %231 = vmatpush1.msra.mxu0 0.0
    %232 = vmatprep.subr.mxu0 0.0
    %233 = vmatpush1.msra.mxu0 0.0
    %234 = vmatprep.subr.mxu0 0.0
    %235 = vmatpush1.msra.mxu0 0.0
    %236 = vmatprep.subr.mxu0 0.0
    %237 = vmatpush1.msra.mxu0 0.0
    %238 = vmatprep.subr.mxu0 0.0
    %239 = vmatpush1.msra.mxu0 0.0
    %240 = vmatprep.subr.mxu0 0.0
    %241 = vmatpush1.msra.mxu0 0.0
    %242 = vmatprep.subr.mxu0 0.0
    %243 = vmatpush1.msra.mxu0 0.0
    %244 = vmatprep.subr.mxu0 0.0
    %245 = vmatpush1.msra.mxu0 0.0
    %246 = vmatprep.subr.mxu0 0.0
    %247 = vmatpush1.msra.mxu0 0.0
    %248 = vmatprep.subr.mxu0 0.0
    %249 = vmatpush1.msra.mxu0 0.0
    %250 = vmatprep.subr.mxu0 0.0
    %251 = vmatpush1.msra.mxu0 0.0
    %252 = vmatprep.subr.mxu0 0.0
    %253 = vmatpush1.msra.mxu0 %v29
    %254 = vmatprep.subr.mxu0 0.0
    %255 = vmatpush1.msra.mxu0 %v28
    %256 = vmatprep.subr.mxu0 0.0
    %257 = vmatpush1.msra.mxu0 %v27
    %258 = vmatprep.subr.mxu0 0.0
    %259 = vmatpush1.msra.mxu0 %v26
    %260 = vmatprep.subr.mxu0 0.0
    %261 = vmatpush2.msra.mxu0 0.0
    %262 = vmatprep.subr.mxu0 0.0
    %263 = vmatpush2.msra.mxu0 0.0
    %264 = vmatprep.subr.mxu0 0.0
    %265 = vmatpush2.msra.mxu0 0.0
    %266 = vmatprep.subr.mxu0 0.0
    %267 = vmatpush2.msra.mxu0 0.0
    %268 = vmatprep.subr.mxu0 0.0
    %269 = vmatpush2.msra.mxu0 0.0
    %270 = vmatprep.subr.mxu0 0.0
    %271 = vmatpush2.msra.mxu0 0.0
    %272 = vmatprep.subr.mxu0 0.0
    %273 = vmatpush2.msra.mxu0 0.0
    %274 = vmatprep.subr.mxu0 0.0
    %275 = vmatpush2.msra.mxu0 0.0
    %276 = vmatprep.subr.mxu0 0.0
    %277 = vmatpush2.msra.mxu0 0.0
    %278 = vmatprep.subr.mxu0 0.0
    %279 = vmatpush2.msra.mxu0 0.0
    %280 = vmatprep.subr.mxu0 0.0
    %281 = vmatpush2.msra.mxu0 0.0
    %282 = vmatprep.subr.mxu0 0.0
    %283 = vmatpush2.msra.mxu0 0.0
    %284 = vmatprep.subr.mxu0 0.0
    %285 = vmatpush2.msra.mxu0 0.0
    %286 = vmatprep.subr.mxu0 0.0
    %287 = vmatpush2.msra.mxu0 0.0
    %288 = vmatprep.subr.mxu0 0.0
    %289 = vmatpush2.msra.mxu0 0.0
    %290 = vmatprep.subr.mxu0 0.0
    %291 = vmatpush2.msra.mxu0 0.0
    %292 = vmatprep.mubr.f32.mxu0 0.0
    %293 = vmatmul.mubr.f32.gmra.mxu0 %v226
    %v294 = vpop.f32.mrf.mxu0
    %v295 = vadd.f32 0.0, %v294
    %v296 = vpop.f32.mrf.mxu0
    %297 = vdwg.mxu0
    %v299 = vrot.slane %v295, 6
    %v301 = vadd.f32 %v120, %v299
    %v302 = vxor.u32 %v301, 2147483648
    %v303 = vmul.f32 %v302, 1.442695
    %v304 = vpow.pop %v303
    %v305 = vadd.f32 %v304, 1.0
    %v306 = vrcp.pop %v305
    %v307 = vmul.f32 1.0, %v306
    %v308 = vmul.f32 %v307, 2.0
    %v309 = vsub.f32 %v308, 1.0
    %v311 = vrot.slane %v216, 6
    %v313 = vmul.f32 %v307, %v311
    %315 = vrot.lane.b32.xlu0 %v309, 64
    %v316 = vpop.permute.xlu0 %315
    %v318 = vmul.f32 %v307, %v316
    %320 = vrot.lane.b32.xlu0 %v318, 32
    %v321 = vpop.permute.xlu0 %320
    %v323 = vadd.f32 %v313, %v321
    %v324 = vtanh.pop %v323
    %326 = vrot.lane.b32.xlu0 %v324, 64
    %v327 = vpop.permute.xlu0 %326
    %v329 = vmul.f32 %v307, %v327
    %v331 = vrot.slane %v329, 2
    %332 = vrot.lane.b32.xlu0 %v331, 32
    %v333 = vpop.permute.xlu0 %332
    %v334 = vsel %vm123, %v333, 0
    %336 = vmatprep.subr.mxu0 0.0
    %337 = vmatpush1.msra.mxu0 0.0
    %338 = vmatprep.subr.mxu0 0.0
    %339 = vmatpush1.msra.mxu0 0.0
    %340 = vmatprep.subr.mxu0 0.0
    %341 = vmatpush1.msra.mxu0 0.0
    %342 = vmatprep.subr.mxu0 0.0
    %343 = vmatpush1.msra.mxu0 0.0
    %344 = vmatprep.subr.mxu0 0.0
    %345 = vmatpush1.msra.mxu0 0.0
    %346 = vmatprep.subr.mxu0 0.0
    %347 = vmatpush1.msra.mxu0 0.0
    %348 = vmatprep.subr.mxu0 0.0
    %349 = vmatpush1.msra.mxu0 0.0
    %350 = vmatprep.subr.mxu0 0.0
    %351 = vmatpush1.msra.mxu0 0.0
    %352 = vmatprep.subr.mxu0 0.0
    %353 = vmatpush1.msra.mxu0 0.0
    %354 = vmatprep.subr.mxu0 0.0
    %355 = vmatpush1.msra.mxu0 0.0
    %356 = vmatprep.subr.mxu0 0.0
    %357 = vmatpush1.msra.mxu0 0.0
    %358 = vmatprep.subr.mxu0 0.0
    %359 = vmatpush1.msra.mxu0 0.0
    %360 = vmatprep.subr.mxu0 0.0
    %361 = vmatpush1.msra.mxu0 %v29
    %362 = vmatprep.subr.mxu0 0.0
    %363 = vmatpush1.msra.mxu0 %v28
    %364 = vmatprep.subr.mxu0 0.0
    %365 = vmatpush1.msra.mxu0 %v27
    %366 = vmatprep.subr.mxu0 0.0
    %367 = vmatpush1.msra.mxu0 %v26
    %368 = vmatprep.subr.mxu0 0.0
    %369 = vmatpush2.msra.mxu0 0.0
    %370 = vmatprep.subr.mxu0 0.0
    %371 = vmatpush2.msra.mxu0 0.0
    %372 = vmatprep.subr.mxu0 0.0
    %373 = vmatpush2.msra.mxu0 0.0
    %374 = vmatprep.subr.mxu0 0.0
    %375 = vmatpush2.msra.mxu0 0.0
    %376 = vmatprep.subr.mxu0 0.0
    %377 = vmatpush2.msra.mxu0 0.0
    %378 = vmatprep.subr.mxu0 0.0
    %379 = vmatpush2.msra.mxu0 0.0
    %380 = vmatprep.subr.mxu0 0.0
    %381 = vmatpush2.msra.mxu0 0.0
    %382 = vmatprep.subr.mxu0 0.0
    %383 = vmatpush2.msra.mxu0 0.0
    %384 = vmatprep.subr.mxu0 0.0
    %385 = vmatpush2.msra.mxu0 0.0
    %386 = vmatprep.subr.mxu0 0.0
    %387 = vmatpush2.msra.mxu0 0.0
    %388 = vmatprep.subr.mxu0 0.0
    %389 = vmatpush2.msra.mxu0 0.0
    %390 = vmatprep.subr.mxu0 0.0
    %391 = vmatpush2.msra.mxu0 0.0
    %392 = vmatprep.subr.mxu0 0.0
    %393 = vmatpush2.msra.mxu0 0.0
    %394 = vmatprep.subr.mxu0 0.0
    %395 = vmatpush2.msra.mxu0 0.0
    %396 = vmatprep.subr.mxu0 0.0
    %397 = vmatpush2.msra.mxu0 0.0
    %398 = vmatprep.subr.mxu0 0.0
    %399 = vmatpush2.msra.mxu0 0.0
    %400 = vmatprep.mubr.f32.mxu0 0.0
    %401 = vmatmul.mubr.f32.gmra.mxu0 %v334
    %v402 = vpop.f32.mrf.mxu0
    %v403 = vadd.f32 0.0, %v402
    %v404 = vpop.f32.mrf.mxu0
    %405 = vdwg.mxu0
    %v407 = vrot.slane %v403, 4
    %v409 = vadd.f32 %v120, %v407
    %v410 = vxor.u32 %v409, 2147483648
    %v411 = vmul.f32 %v410, 1.442695
    %v412 = vpow.pop %v411
    %v413 = vadd.f32 %v412, 1.0
    %v414 = vrcp.pop %v413
    %v415 = vmul.f32 1.0, %v414
    %v416 = vmul.f32 %v415, 2.0
    %v417 = vsub.f32 %v416, 1.0
    %v419 = vrot.slane %v323, 6
    %v421 = vmul.f32 %v415, %v419
    %423 = vrot.lane.b32.xlu0 %v417, 64
    %v424 = vpop.permute.xlu0 %423
    %v426 = vmul.f32 %v415, %v424
    %428 = vrot.lane.b32.xlu0 %v426, 32
    %v429 = vpop.permute.xlu0 %428
    %v431 = vadd.f32 %v421, %v429
    %v432 = vtanh.pop %v431
    %434 = vrot.lane.b32.xlu0 %v432, 64
    %v435 = vpop.permute.xlu0 %434
    %v437 = vmul.f32 %v415, %v435
    %v439 = vrot.slane %v437, 4
    %440 = vrot.lane.b32.xlu0 %v439, 32
    %v441 = vpop.permute.xlu0 %440
    %v442 = vsel %vm123, %v441, 0
    %444 = vmatprep.subr.mxu0 0.0
    %445 = vmatpush1.msra.mxu0 0.0
    %446 = vmatprep.subr.mxu0 0.0
    %447 = vmatpush1.msra.mxu0 0.0
    %448 = vmatprep.subr.mxu0 0.0
    %449 = vmatpush1.msra.mxu0 0.0
    %450 = vmatprep.subr.mxu0 0.0
    %451 = vmatpush1.msra.mxu0 0.0
    %452 = vmatprep.subr.mxu0 0.0
    %453 = vmatpush1.msra.mxu0 0.0
    %454 = vmatprep.subr.mxu0 0.0
    %455 = vmatpush1.msra.mxu0 0.0
    %456 = vmatprep.subr.mxu0 0.0
    %457 = vmatpush1.msra.mxu0 0.0
    %458 = vmatprep.subr.mxu0 0.0
    %459 = vmatpush1.msra.mxu0 0.0
    %460 = vmatprep.subr.mxu0 0.0
    %461 = vmatpush1.msra.mxu0 0.0
    %462 = vmatprep.subr.mxu0 0.0
    %463 = vmatpush1.msra.mxu0 0.0
    %464 = vmatprep.subr.mxu0 0.0
    %465 = vmatpush1.msra.mxu0 0.0
    %466 = vmatprep.subr.mxu0 0.0
    %467 = vmatpush1.msra.mxu0 0.0
    %468 = vmatprep.subr.mxu0 0.0
    %469 = vmatpush1.msra.mxu0 %v29
    %470 = vmatprep.subr.mxu0 0.0
    %471 = vmatpush1.msra.mxu0 %v28
    %472 = vmatprep.subr.mxu0 0.0
    %473 = vmatpush1.msra.mxu0 %v27
    %474 = vmatprep.subr.mxu0 0.0
    %475 = vmatpush1.msra.mxu0 %v26
    %476 = vmatprep.subr.mxu0 0.0
    %477 = vmatpush2.msra.mxu0 0.0
    %478 = vmatprep.subr.mxu0 0.0
    %479 = vmatpush2.msra.mxu0 0.0
    %480 = vmatprep.subr.mxu0 0.0
    %481 = vmatpush2.msra.mxu0 0.0
    %482 = vmatprep.subr.mxu0 0.0
    %483 = vmatpush2.msra.mxu0 0.0
    %484 = vmatprep.subr.mxu0 0.0
    %485 = vmatpush2.msra.mxu0 0.0
    %486 = vmatprep.subr.mxu0 0.0
    %487 = vmatpush2.msra.mxu0 0.0
    %488 = vmatprep.subr.mxu0 0.0
    %489 = vmatpush2.msra.mxu0 0.0
    %490 = vmatprep.subr.mxu0 0.0
    %491 = vmatpush2.msra.mxu0 0.0
    %492 = vmatprep.subr.mxu0 0.0
    %493 = vmatpush2.msra.mxu0 0.0
    %494 = vmatprep.subr.mxu0 0.0
    %495 = vmatpush2.msra.mxu0 0.0
    %496 = vmatprep.subr.mxu0 0.0
    %497 = vmatpush2.msra.mxu0 0.0
    %498 = vmatprep.subr.mxu0 0.0
    %499 = vmatpush2.msra.mxu0 0.0
    %500 = vmatprep.subr.mxu0 0.0
    %501 = vmatpush2.msra.mxu0 0.0
    %502 = vmatprep.subr.mxu0 0.0
    %503 = vmatpush2.msra.mxu0 0.0
    %504 = vmatprep.subr.mxu0 0.0
    %505 = vmatpush2.msra.mxu0 0.0
    %506 = vmatprep.subr.mxu0 0.0
    %507 = vmatpush2.msra.mxu0 0.0
    %508 = vmatprep.mubr.f32.mxu0 0.0
    %509 = vmatmul.mubr.f32.gmra.mxu0 %v442
    %v510 = vpop.f32.mrf.mxu0
    %v511 = vadd.f32 0.0, %v510
    %v512 = vpop.f32.mrf.mxu0
    %513 = vdwg.mxu0
    %v515 = vrot.slane %v511, 2
    %v517 = vadd.f32 %v120, %v515
    %v518 = vxor.u32 %v517, 2147483648
    %v519 = vmul.f32 %v518, 1.442695
    %v520 = vpow.pop %v519
    %v521 = vadd.f32 %v520, 1.0
    %v522 = vrcp.pop %v521
    %v523 = vmul.f32 1.0, %v522
    %v524 = vmul.f32 %v523, 2.0
    %v525 = vsub.f32 %v524, 1.0
    %v527 = vrot.slane %v431, 6
    %v529 = vmul.f32 %v523, %v527
    %531 = vrot.lane.b32.xlu0 %v525, 64
    %v532 = vpop.permute.xlu0 %531
    %v534 = vmul.f32 %v523, %v532
    %536 = vrot.lane.b32.xlu0 %v534, 32
    %v537 = vpop.permute.xlu0 %536
    %v539 = vadd.f32 %v529, %v537
    %v540 = vtanh.pop %v539
    %542 = vrot.lane.b32.xlu0 %v540, 64
    %v543 = vpop.permute.xlu0 %542
    %v545 = vmul.f32 %v523, %v543
    %vm546 = vcmask 1041408
    %v547 = vsel %vm546, %v222, %v329
    %vm548 = vcmask 1043456
    %v549 = vsel %vm548, %v547, %v437
    %vm550 = vcmask 1045504
    %v551 = vsel %vm550, %v549, %v545
    %v552 = vlaneseq
    %v553 = vshrl.u32 %v552, 7
    %v554 = vsub.s32 1, %v553
    %v555 = vrot.slane %v43, %v554
    %557 = vrot.lane.b32.xlu0 %v551, 32
    %v558 = vpop.permute.xlu0 %557
    %v559 = vsel %vm123, %v558, 0
    %561 = vmatprep.subr.mxu0 0.0
    %562 = vmatpush1.msra.mxu0 0.0
    %563 = vmatprep.subr.mxu0 0.0
    %564 = vmatpush1.msra.mxu0 0.0
    %565 = vmatprep.subr.mxu0 0.0
    %566 = vmatpush1.msra.mxu0 0.0
    %567 = vmatprep.subr.mxu0 0.0
    %568 = vmatpush1.msra.mxu0 0.0
    %569 = vmatprep.subr.mxu0 0.0
    %570 = vmatpush1.msra.mxu0 0.0
    %571 = vmatprep.subr.mxu0 0.0
    %572 = vmatpush1.msra.mxu0 0.0
    %573 = vmatprep.subr.mxu0 0.0
    %574 = vmatpush1.msra.mxu0 0.0
    %575 = vmatprep.subr.mxu0 0.0
    %576 = vmatpush1.msra.mxu0 0.0
    %577 = vmatprep.subr.mxu0 0.0
    %578 = vmatpush1.msra.mxu0 0.0
    %579 = vmatprep.subr.mxu0 0.0
    %580 = vmatpush1.msra.mxu0 0.0
    %581 = vmatprep.subr.mxu0 0.0
    %582 = vmatpush1.msra.mxu0 0.0
    %583 = vmatprep.subr.mxu0 0.0
    %584 = vmatpush1.msra.mxu0 0.0
    %585 = vmatprep.subr.mxu0 0.0
    %586 = vmatpush1.msra.mxu0 %v33
    %587 = vmatprep.subr.mxu0 0.0
    %588 = vmatpush1.msra.mxu0 %v32
    %589 = vmatprep.subr.mxu0 0.0
    %590 = vmatpush1.msra.mxu0 %v31
    %591 = vmatprep.subr.mxu0 0.0
    %592 = vmatpush1.msra.mxu0 %v30
    %593 = vmatprep.subr.mxu0 0.0
    %594 = vmatpush2.msra.mxu0 0.0
    %595 = vmatprep.subr.mxu0 0.0
    %596 = vmatpush2.msra.mxu0 0.0
    %597 = vmatprep.subr.mxu0 0.0
    %598 = vmatpush2.msra.mxu0 0.0
    %599 = vmatprep.subr.mxu0 0.0
    %600 = vmatpush2.msra.mxu0 0.0
    %601 = vmatprep.subr.mxu0 0.0
    %602 = vmatpush2.msra.mxu0 0.0
    %603 = vmatprep.subr.mxu0 0.0
    %604 = vmatpush2.msra.mxu0 0.0
    %605 = vmatprep.subr.mxu0 0.0
    %606 = vmatpush2.msra.mxu0 0.0
    %607 = vmatprep.subr.mxu0 0.0
    %608 = vmatpush2.msra.mxu0 0.0
    %609 = vmatprep.subr.mxu0 0.0
    %610 = vmatpush2.msra.mxu0 0.0
    %611 = vmatprep.subr.mxu0 0.0
    %612 = vmatpush2.msra.mxu0 0.0
    %613 = vmatprep.subr.mxu0 0.0
    %614 = vmatpush2.msra.mxu0 0.0
    %615 = vmatprep.subr.mxu0 0.0
    %616 = vmatpush2.msra.mxu0 0.0
    %617 = vmatprep.subr.mxu0 0.0
    %618 = vmatpush2.msra.mxu0 0.0
    %619 = vmatprep.subr.mxu0 0.0
    %620 = vmatpush2.msra.mxu0 0.0
    %621 = vmatprep.subr.mxu0 0.0
    %622 = vmatpush2.msra.mxu0 0.0
    %623 = vmatprep.subr.mxu0 0.0
    %624 = vmatpush2.msra.mxu0 0.0
    %625 = vmatprep.mubr.f32.mxu0 0.0
    %626 = vmatmul.mubr.f32.gmra.mxu0 %v559
    %v627 = vpop.f32.mrf.mxu0
    %v628 = vadd.f32 %v555, %v627
    %v629 = vpop.f32.mrf.mxu0
    %630 = vdwg.mxu0
    %v632 = vrot.slane %v628, 6
    %v634 = vrot.slane %v628, 4
    %v636 = vrot.slane %v628, 2
    %v638 = vsel %vm546, %v632, %v634
    %v639 = vsel %vm548, %v638, %v636
    %v640 = vsel %vm550, %v639, %v628
    %642 = vrot.lane.b32.xlu0 %v640, 32
    %v643 = vpop.permute.xlu0 %642
    %v645 = vmul.f32 %v628, %v643
    %647 = vrot.lane.b32.xlu0 %v645, 96
    %v648 = vpop.permute.xlu0 %647
    %v649 = vsel %vm123, %v648, 0
    %651 = vmatprep.subr.mxu0 0.0
    %652 = vmatpush1.msra.mxu0 0.0
    %653 = vmatprep.subr.mxu0 0.0
    %654 = vmatpush1.msra.mxu0 0.0
    %655 = vmatprep.subr.mxu0 0.0
    %656 = vmatpush1.msra.mxu0 0.0
    %657 = vmatprep.subr.mxu0 0.0
    %658 = vmatpush1.msra.mxu0 0.0
    %659 = vmatprep.subr.mxu0 0.0
    %660 = vmatpush1.msra.mxu0 0.0
    %661 = vmatprep.subr.mxu0 0.0
    %662 = vmatpush1.msra.mxu0 0.0
    %663 = vmatprep.subr.mxu0 0.0
    %664 = vmatpush1.msra.mxu0 0.0
    %665 = vmatprep.subr.mxu0 0.0
    %666 = vmatpush1.msra.mxu0 0.0
    %667 = vmatprep.subr.mxu0 0.0
    %668 = vmatpush1.msra.mxu0 0.0
    %669 = vmatprep.subr.mxu0 0.0
    %670 = vmatpush1.msra.mxu0 0.0
    %671 = vmatprep.subr.mxu0 0.0
    %672 = vmatpush1.msra.mxu0 0.0
    %673 = vmatprep.subr.mxu0 0.0
    %674 = vmatpush1.msra.mxu0 0.0
    %675 = vmatprep.subr.mxu0 0.0
    %676 = vmatpush1.msra.mxu0 %v41
    %677 = vmatprep.subr.mxu0 0.0
    %678 = vmatpush1.msra.mxu0 %v40
    %679 = vmatprep.subr.mxu0 0.0
    %680 = vmatpush1.msra.mxu0 %v39
    %681 = vmatprep.subr.mxu0 0.0
    %682 = vmatpush1.msra.mxu0 %v38
    %683 = vmatprep.subr.mxu0 0.0
    %684 = vmatpush2.msra.mxu0 0.0
    %685 = vmatprep.subr.mxu0 0.0
    %686 = vmatpush2.msra.mxu0 0.0
    %687 = vmatprep.subr.mxu0 0.0
    %688 = vmatpush2.msra.mxu0 0.0
    %689 = vmatprep.subr.mxu0 0.0
    %690 = vmatpush2.msra.mxu0 0.0
    %691 = vmatprep.subr.mxu0 0.0
    %692 = vmatpush2.msra.mxu0 0.0
    %693 = vmatprep.subr.mxu0 0.0
    %694 = vmatpush2.msra.mxu0 0.0
    %695 = vmatprep.subr.mxu0 0.0
    %696 = vmatpush2.msra.mxu0 0.0
    %697 = vmatprep.subr.mxu0 0.0
    %698 = vmatpush2.msra.mxu0 0.0
    %699 = vmatprep.subr.mxu0 0.0
    %700 = vmatpush2.msra.mxu0 0.0
    %701 = vmatprep.subr.mxu0 0.0
    %702 = vmatpush2.msra.mxu0 0.0
    %703 = vmatprep.subr.mxu0 0.0
    %704 = vmatpush2.msra.mxu0 0.0
    %705 = vmatprep.subr.mxu0 0.0
    %706 = vmatpush2.msra.mxu0 0.0
    %707 = vmatprep.subr.mxu0 0.0
    %708 = vmatpush2.msra.mxu0 0.0
    %709 = vmatprep.subr.mxu0 0.0
    %710 = vmatpush2.msra.mxu0 0.0
    %711 = vmatprep.subr.mxu0 0.0
    %712 = vmatpush2.msra.mxu0 0.0
    %713 = vmatprep.subr.mxu0 0.0
    %714 = vmatpush2.msra.mxu0 0.0
    %715 = vmatprep.mubr.f32.mxu0 0.0
    %716 = vmatmul.mubr.f32.gmra.mxu0 %v649
    %v717 = vpop.f32.mrf.mxu0
    %v718 = vadd.f32 0.0, %v717
    %v719 = vpop.f32.mrf.mxu0
    %720 = vdwg.mxu0
    %v722 = vrot.slane %v718, 2
    %v724 = vmax.f32 %v718, %v722
    %v725 = vrot.slane %v718, 4
    %v727 = vmax.f32 %v724, %v725
    %v728 = vrot.slane %v718, 6
    %v730 = vmax.f32 %v727, %v728
    %v732 = vrot.slane %v730, 6
    %v734 = vrot.slane %v730, 4
    %v736 = vrot.slane %v730, 2
    %v738 = vsel %vm546, %v730, %v732
    %v739 = vsel %vm548, %v738, %v734
    %v740 = vsel %vm550, %v739, %v736
    %v741 = vsub.f32 %v718, %v740
    %v742 = vmul.f32 %v741, 1.442695
    %v743 = vpow.pop %v742
    %v745 = vrot.slane %v743, 2
    %v747 = vadd.f32 %v743, %v745
    %v748 = vrot.slane %v743, 4
    %v750 = vadd.f32 %v747, %v748
    %v751 = vrot.slane %v743, 6
    %v753 = vadd.f32 %v750, %v751
    %v754 = vrcp.pop %v753
    %v756 = vrot.slane %v754, 6
    %v758 = vrot.slane %v754, 4
    %v760 = vrot.slane %v754, 2
    %v762 = vsel %vm546, %v754, %v756
    %v763 = vsel %vm548, %v762, %v758
    %v764 = vsel %vm550, %v763, %v760
    %v765 = vmul.f32 %v743, %v764
    %vm766 = vcmask 31744
    %v768 = vsel %vm766, %v765, 0
    %v771 = vsel %vm548, %v42, 0
    %773 = vmatprep.subr.mxu0 0.0
    %774 = vmatpush1.msra.mxu0 0.0
    %775 = vmatprep.subr.mxu0 0.0
    %776 = vmatpush1.msra.mxu0 0.0
    %777 = vmatprep.subr.mxu0 0.0
    %778 = vmatpush1.msra.mxu0 0.0
    %779 = vmatprep.subr.mxu0 0.0
    %780 = vmatpush1.msra.mxu0 0.0
    %781 = vmatprep.subr.mxu0 0.0
    %782 = vmatpush1.msra.mxu0 0.0
    %783 = vmatprep.subr.mxu0 0.0
    %784 = vmatpush1.msra.mxu0 0.0
    %785 = vmatprep.subr.mxu0 0.0
    %786 = vmatpush1.msra.mxu0 0.0
    %787 = vmatprep.subr.mxu0 0.0
    %788 = vmatpush1.msra.mxu0 0.0
    %789 = vmatprep.subr.mxu0 0.0
    %790 = vmatpush1.msra.mxu0 0.0
    %791 = vmatprep.subr.mxu0 0.0
    %792 = vmatpush1.msra.mxu0 0.0
    %793 = vmatprep.subr.mxu0 0.0
    %794 = vmatpush1.msra.mxu0 0.0
    %795 = vmatprep.subr.mxu0 0.0
    %796 = vmatpush1.msra.mxu0 0.0
    %797 = vmatprep.subr.mxu0 0.0
    %798 = vmatpush1.msra.mxu0 0.0
    %799 = vmatprep.subr.mxu0 0.0
    %800 = vmatpush1.msra.mxu0 0.0
    %801 = vmatprep.subr.mxu0 0.0
    %802 = vmatpush1.msra.mxu0 0.0
    %803 = vmatprep.subr.mxu0 0.0
    %804 = vmatpush1.msra.mxu0 %v771
    %805 = vmatprep.subr.mxu0 0.0
    %806 = vmatpush2.msra.mxu0 0.0
    %807 = vmatprep.subr.mxu0 0.0
    %808 = vmatpush2.msra.mxu0 0.0
    %809 = vmatprep.subr.mxu0 0.0
    %810 = vmatpush2.msra.mxu0 0.0
    %811 = vmatprep.subr.mxu0 0.0
    %812 = vmatpush2.msra.mxu0 0.0
    %813 = vmatprep.subr.mxu0 0.0
    %814 = vmatpush2.msra.mxu0 0.0
    %815 = vmatprep.subr.mxu0 0.0
    %816 = vmatpush2.msra.mxu0 0.0
    %817 = vmatprep.subr.mxu0 0.0
    %818 = vmatpush2.msra.mxu0 0.0
    %819 = vmatprep.subr.mxu0 0.0
    %820 = vmatpush2.msra.mxu0 0.0
    %821 = vmatprep.subr.mxu0 0.0
    %822 = vmatpush2.msra.mxu0 0.0
    %823 = vmatprep.subr.mxu0 0.0
    %824 = vmatpush2.msra.mxu0 0.0
    %825 = vmatprep.subr.mxu0 0.0
    %826 = vmatpush2.msra.mxu0 0.0
    %827 = vmatprep.subr.mxu0 0.0
    %828 = vmatpush2.msra.mxu0 0.0
    %829 = vmatprep.subr.mxu0 0.0
    %830 = vmatpush2.msra.mxu0 0.0
    %831 = vmatprep.subr.mxu0 0.0
    %832 = vmatpush2.msra.mxu0 0.0
    %833 = vmatprep.subr.mxu0 0.0
    %834 = vmatpush2.msra.mxu0 0.0
    %835 = vmatprep.subr.mxu0 0.0
    %836 = vmatpush2.msra.mxu0 0.0
    %837 = vmatprep.mubr.f32.mxu0 0.0
    %838 = vmatmul.mubr.f32.gmra.mxu0 %v768
    %v839 = vpop.f32.mrf.mxu0
    %v840 = vadd.f32 0.0, %v839
    %v841 = vpop.f32.mrf.mxu0
    %842 = vdwg.mxu0
    %843 = vrot.lane.b32.xlu0 %v628, 64
    %v844 = vpop.permute.xlu0 %843
    %v846 = vmul.f32 %v840, %v844
    %v848 = vrot.slane %v846, 2
    %v850 = vadd.f32 %v846, %v848
    %v851 = vrot.slane %v846, 4
    %v853 = vadd.f32 %v850, %v851
    %v854 = vrot.slane %v846, 6
    %v856 = vadd.f32 %v853, %v854
    %v857 = vlaneseq
    %v858 = vshrl.u32 %v857, 7
    %v859 = vsub.s32 2, %v858
    %v860 = vrot.slane %v43, %v859
    %v862 = vsel %vm123, %v856, 0
    %864 = vmatprep.subr.mxu0 0.0
    %865 = vmatpush1.msra.mxu0 0.0
    %866 = vmatprep.subr.mxu0 0.0
    %867 = vmatpush1.msra.mxu0 0.0
    %868 = vmatprep.subr.mxu0 0.0
    %869 = vmatpush1.msra.mxu0 0.0
    %870 = vmatprep.subr.mxu0 0.0
    %871 = vmatpush1.msra.mxu0 0.0
    %872 = vmatprep.subr.mxu0 0.0
    %873 = vmatpush1.msra.mxu0 0.0
    %874 = vmatprep.subr.mxu0 0.0
    %875 = vmatpush1.msra.mxu0 0.0
    %876 = vmatprep.subr.mxu0 0.0
    %877 = vmatpush1.msra.mxu0 0.0
    %878 = vmatprep.subr.mxu0 0.0
    %879 = vmatpush1.msra.mxu0 0.0
    %880 = vmatprep.subr.mxu0 0.0
    %881 = vmatpush1.msra.mxu0 0.0
    %882 = vmatprep.subr.mxu0 0.0
    %883 = vmatpush1.msra.mxu0 0.0
    %884 = vmatprep.subr.mxu0 0.0
    %885 = vmatpush1.msra.mxu0 0.0
    %886 = vmatprep.subr.mxu0 0.0
    %887 = vmatpush1.msra.mxu0 0.0
    %888 = vmatprep.subr.mxu0 0.0
    %889 = vmatpush1.msra.mxu0 %v37
    %890 = vmatprep.subr.mxu0 0.0
    %891 = vmatpush1.msra.mxu0 %v36
    %892 = vmatprep.subr.mxu0 0.0
    %893 = vmatpush1.msra.mxu0 %v35
    %894 = vmatprep.subr.mxu0 0.0
    %895 = vmatpush1.msra.mxu0 %v34
    %896 = vmatprep.subr.mxu0 0.0
    %897 = vmatpush2.msra.mxu0 0.0
    %898 = vmatprep.subr.mxu0 0.0
    %899 = vmatpush2.msra.mxu0 0.0
    %900 = vmatprep.subr.mxu0 0.0
    %901 = vmatpush2.msra.mxu0 0.0
    %902 = vmatprep.subr.mxu0 0.0
    %903 = vmatpush2.msra.mxu0 0.0
    %904 = vmatprep.subr.mxu0 0.0
    %905 = vmatpush2.msra.mxu0 0.0
    %906 = vmatprep.subr.mxu0 0.0
    %907 = vmatpush2.msra.mxu0 0.0
    %908 = vmatprep.subr.mxu0 0.0
    %909 = vmatpush2.msra.mxu0 0.0
    %910 = vmatprep.subr.mxu0 0.0
    %911 = vmatpush2.msra.mxu0 0.0
    %912 = vmatprep.subr.mxu0 0.0
    %913 = vmatpush2.msra.mxu0 0.0
    %914 = vmatprep.subr.mxu0 0.0
    %915 = vmatpush2.msra.mxu0 0.0
    %916 = vmatprep.subr.mxu0 0.0
    %917 = vmatpush2.msra.mxu0 0.0
    %918 = vmatprep.subr.mxu0 0.0
    %919 = vmatpush2.msra.mxu0 0.0
    %920 = vmatprep.subr.mxu0 0.0
    %921 = vmatpush2.msra.mxu0 0.0
    %922 = vmatprep.subr.mxu0 0.0
    %923 = vmatpush2.msra.mxu0 0.0
    %924 = vmatprep.subr.mxu0 0.0
    %925 = vmatpush2.msra.mxu0 0.0
    %926 = vmatprep.subr.mxu0 0.0
    %927 = vmatpush2.msra.mxu0 0.0
    %928 = vmatprep.mubr.f32.mxu0 0.0
    %929 = vmatmul.mubr.f32.gmra.mxu0 %v862
    %v930 = vpop.f32.mrf.mxu0
    %v931 = vadd.f32 %v860, %v930
    %v932 = vpop.f32.mrf.mxu0
    %933 = vdwg.mxu0
    %v934 = vsel %vm546, %v931, 0.0
    %935 = vst [vmem:[%s2] sm:$0xff] %v934
    // Predicated region
    $region14: #{lstm_model_forward.1} parent=1 // pred_check
      _
    $region15: #{lstm_model_forward.1} parent=1 // pred_check_branch
      %937 = sbr.rel (0) target = $region17
    $region16: #{lstm_model_forward.1} parent=1 // pred_region
      _
    $region17: #{lstm_model_forward.1} parent=1 // pred_fallthru
      _
    // Predicated region
    $region18: #{lstm_model_forward.1} parent=1 // pred_check
      _
    $region19: #{lstm_model_forward.1} parent=1 // pred_check_branch
      %939 = sbr.rel (0) target = $region21
    $region20: #{lstm_model_forward.1} parent=1 // pred_region
      _
    $region21: #{lstm_model_forward.1} parent=1 // pred_fallthru
      _
    %940 = vsyncpa [#allocation3], 1

</llo_original>
